<compile_context>
chip_gen: v5e
topology: v5e:2x2
jax: 0.10.0
libtpu: 0.0.40
codegen_flags: <defaults>
</compile_context>

<pallas_src>
import functools

import jax
import jax.numpy as jnp
from jax import lax
from jax.experimental import pallas as pl
from jax.experimental.pallas import tpu as pltpu

BN_EPS = 1e-5


# --------------------------------------------------------------------------- #
# Phase 1: fused 3-branch dilated conv (single matmul) + single-pass BN stats. #
# --------------------------------------------------------------------------- #
def _conv_stats_kernel(p_ref, w_ref, y_ref, sum_ref, ssq_ref):
    # p_ref   : (K, TM)   im2col patch tile (spatial on lanes)
    # w_ref   : (C3, K)   block-diagonal concat of the 3 branch conv weights
    # y_ref   : (C3, TM)  pre-BN (bias-free) conv output tile (streamed to HBM)
    # sum_ref : (C3, 1)   running per-channel sum       (grid accumulator)
    # ssq_ref : (C3, 1)   running per-channel sum-of-sq (grid accumulator)
    # NOTE: conv biases are intentionally omitted -- they cancel under
    # training-mode BatchNorm, so the math is identical without them.
    t = pl.program_id(0)

    y = jnp.dot(w_ref[...], p_ref[...], preferred_element_type=jnp.float32)
    y_ref[...] = y

    @pl.when(t == 0)
    def _():
        sum_ref[...] = jnp.zeros_like(sum_ref)
        ssq_ref[...] = jnp.zeros_like(ssq_ref)

    # XLU reduces run on a different slot than the MXU push -> near-free filler.
    sum_ref[...] += jnp.sum(y, axis=1, keepdims=True)
    ssq_ref[...] += jnp.sum(y * y, axis=1, keepdims=True)


# --------------------------------------------------------------------------- #
# Phase 2: BatchNorm (pre-folded scale/shift) -> ReLU -> fused 1x1 conv.       #
# --------------------------------------------------------------------------- #
def _bn_relu_conv4_kernel(y_ref, scale_ref, shift_ref, w4_ref, b4_ref, o_ref):
    # y_ref (C3, TM), scale/shift (C3, 1), w4 (Cout, C3), b4 (Cout, 1), o (Cout, TM)
    yr = jnp.maximum(y_ref[...] * scale_ref[...] + shift_ref[...], 0.0)
    o_ref[...] = jnp.dot(w4_ref[...], yr,
                         preferred_element_type=jnp.float32) + b4_ref[...]


def _pick_tile_m(m, cap=512):
    """Largest tile <= cap that divides m and is a multiple of 128 (else full m)."""
    if m % 128 != 0:
        return m
    tm = min(m, (cap // 128) * 128)
    while m % tm != 0:
        tm -= 128
    return tm


@functools.partial(jax.jit, static_argnames=("tile_m",))
def double_conv_1(x_nchw, params, tile_m=512):
    """Forward pass of DoubleConv_1 (x2=None path). Input/output are NCHW."""
    x = x_nchw.astype(jnp.float32)
    N, Cin, H, W = x.shape
    Cout = params["b4"].shape[-1]
    C3 = 3 * Cout
    M = N * H * W
    K1 = 9 * Cin
    K = 3 * K1
    K_pad = ((K + 7) // 8) * 8          # keep sublane dim a multiple of 8

    # --- single shared padded copy of x (max halo = 5) ----------------------
    x_pad = jnp.pad(x, ((0, 0), (0, 0), (5, 5), (5, 5)))

    # --- wrapper-side im2col; spatial (n,h,w) flattened onto the lane axis ---
    def patch_t(d):
        off = 5 - d
        taps = [x_pad[:, :, off + ky * d: off + ky * d + H,
                         off + kx * d: off + kx * d + W]
                for ky in range(3) for kx in range(3)]          # 9 x (N,Cin,H,W)
        t = jnp.stack(taps, axis=2)                              # (N,Cin,9,H,W)
        # rows ordered (cin, ky, kx) to match OIHW weight flattening
        return jnp.transpose(t, (1, 2, 0, 3, 4)).reshape(K1, M)

    p_full = jnp.concatenate([patch_t(1), patch_t(2), patch_t(5)], axis=0)  # (K, M)
    if K_pad != K:
        p_full = jnp.pad(p_full, ((0, K_pad - K), (0, 0)))

    # --- block-diagonal fused conv weight for the 3 branches -----------------
    w_bd = jnp.zeros((C3, K_pad), jnp.float32)
    for i, name in enumerate(("w1", "w2", "w3")):
        wm = params[name].reshape(Cout, K1).astype(jnp.float32)
        w_bd = w_bd.at[i * Cout:(i + 1) * Cout, i * K1:(i + 1) * K1].set(wm)

    g_cat = jnp.concatenate([params["g1"], params["g2"], params["g3"]]
                            ).astype(jnp.float32).reshape(C3, 1)
    be_cat = jnp.concatenate([params["be1"], params["be2"], params["be3"]]
                             ).astype(jnp.float32).reshape(C3, 1)

    tm = _pick_tile_m(M, tile_m)
    grid = (M // tm,)

    # ---------------- phase 1: conv + global BN statistics -------------------
    y_cat, ch_sum, ch_ssq = pl.pallas_call(
        _conv_stats_kernel,
        grid=grid,
        in_specs=[
            pl.BlockSpec((K_pad, tm), lambda t: (0, t)),
            pl.BlockSpec((C3, K_pad), lambda t: (0, 0)),
        ],
        out_specs=(
            pl.BlockSpec((C3, tm), lambda t: (0, t)),
            pl.BlockSpec((C3, 1), lambda t: (0, 0)),   # accumulator (same block)
            pl.BlockSpec((C3, 1), lambda t: (0, 0)),   # accumulator (same block)
        ),
        out_shape=(
            jax.ShapeDtypeStruct((C3, M), jnp.float32),
            jax.ShapeDtypeStruct((C3, 1), jnp.float32),
            jax.ShapeDtypeStruct((C3, 1), jnp.float32),
        ),
        compiler_params=pltpu.CompilerParams(
            dimension_semantics=("arbitrary",),        # accumulators carried across grid
            vmem_limit_bytes=32 * 1024 * 1024,
        ),
    )(p_full, w_bd)

    # --- fold BN (training-mode, biased stats over N*H*W) into scale/shift ---
    # conv biases b1/b2/b3 cancel under train-mode BN, so they never enter.
    mean = ch_sum / M
    var = ch_ssq / M - mean * mean
    inv = lax.rsqrt(var + BN_EPS)
    scale = g_cat * inv                   # (C3, 1)
    shift = be_cat - mean * scale         # (C3, 1)

    w4 = params["w4"].reshape(Cout, C3).astype(jnp.float32)
    b4 = params["b4"].astype(jnp.float32).reshape(Cout, 1)

    # ---------------- phase 2: BN -> ReLU -> 1x1 conv -------------------------
    out_t = pl.pallas_call(
        _bn_relu_conv4_kernel,
        grid=grid,
        in_specs=[
            pl.BlockSpec((C3, tm), lambda t: (0, t)),
            pl.BlockSpec((C3, 1), lambda t: (0, 0)),
            pl.BlockSpec((C3, 1), lambda t: (0, 0)),
            pl.BlockSpec((Cout, C3), lambda t: (0, 0)),
            pl.BlockSpec((Cout, 1), lambda t: (0, 0)),
        ],
        out_specs=pl.BlockSpec((Cout, tm), lambda t: (0, t)),
        out_shape=jax.ShapeDtypeStruct((Cout, M), jnp.float32),
        compiler_params=pltpu.CompilerParams(
            dimension_semantics=("parallel",),          # independent tiles -> megacore
            vmem_limit_bytes=32 * 1024 * 1024,
        ),
    )(y_cat, scale, shift, w4, b4)

    # (Cout, N*H*W) -> (N, Cout, H, W)
    return jnp.transpose(out_t.reshape(Cout, N, H, W), (1, 0, 2, 3))


# --------------------------------------------------------------------------- #
# Pure-JAX (XLA) reference for correctness checking.                           #
# --------------------------------------------------------------------------- #
def _reference(x_nchw, params):
    x = x_nchw.astype(jnp.float32)

    def conv(x, w, b, d, p):
        y = lax.conv_general_dilated(x, w, window_strides=(1, 1),
                                     padding=((p, p), (p, p)),
                                     rhs_dilation=(d, d),
                                     dimension_numbers=("NCHW", "OIHW", "NCHW"))
        return y + b[None, :, None, None]

    def bn_relu(y, g, be):
        mean = jnp.mean(y, axis=(0, 2, 3), keepdims=True)
        var = jnp.mean((y - mean) ** 2, axis=(0, 2, 3), keepdims=True)
        yh = (y - mean) * lax.rsqrt(var + BN_EPS)
        yh = yh * g[None, :, None, None] + be[None, :, None, None]
        return jnp.maximum(yh, 0.0)

    y1 = bn_relu(conv(x, params["w1"], params["b1"], 1, 1), params["g1"], params["be1"])
    y2 = bn_relu(conv(x, params["w2"], params["b2"], 2, 2), params["g2"], params["be2"])
    y3 = bn_relu(conv(x, params["w3"], params["b3"], 5, 5), params["g3"], params["be3"])
    yc = jnp.concatenate([y1, y2, y3], axis=1)
    y = lax.conv_general_dilated(yc, params["w4"], (1, 1), "VALID",
                                 dimension_numbers=("NCHW", "OIHW", "NCHW"))
    return y + params["b4"][None, :, None, None]


def _init_params(key, cin, cout):
    ks = jax.random.split(key, 12)
    p = {}
    for i, name in enumerate(("w1", "w2", "w3")):
        p[name] = 0.1 * jax.random.normal(ks[i], (cout, cin, 3, 3), jnp.float32)
        p["b" + name[1]] = 0.1 * jax.random.normal(ks[3 + i], (cout,), jnp.float32)
        p["g" + name[1]] = 1.0 + 0.1 * jax.random.normal(ks[6 + i], (cout,), jnp.float32)
        p["be" + name[1]] = 0.1 * jax.random.normal(ks[9 + i], (cout,), jnp.float32)
    p["w4"] = 0.1 * jax.random.normal(ks[10], (cout, 3 * cout, 1, 1), jnp.float32)
    p["b4"] = 0.1 * jax.random.normal(ks[11], (cout,), jnp.float32)
    return p


if __name__ == "__main__":
    key = jax.random.PRNGKey(0)
    kx, kp = jax.random.split(key)

    N, Cin, Cout, H, W = 2, 4, 8, 16, 16
    x = jax.random.normal(kx, (N, Cin, H, W), jnp.float32)
    params = _init_params(kp, Cin, Cout)

    out = jax.block_until_ready(double_conv_1(x, params))
    ref = jax.block_until_ready(_reference(x, params))

    assert out.shape == (N, Cout, H, W)
    err = float(jnp.max(jnp.abs(out - ref)))
    assert jnp.allclose(out, ref, atol=1e-4, rtol=1e-4), f"max abs err {err}"
    print("KERNEL_OK")
</pallas_src>

<mosaic_0001>
module attributes {stable_mosaic.version = 11 : i64} {
  func.func @_conv_stats_kernel(%arg0: i32, %arg1: memref<112x512xf32, #tpu.memory_space<vmem>>, %arg2: memref<24x112xf32, #tpu.memory_space<vmem>>, %arg3: memref<24x512xf32, #tpu.memory_space<vmem>>, %arg4: memref<24x1xf32, #tpu.memory_space<vmem>>, %arg5: memref<24x1xf32, #tpu.memory_space<vmem>>) attributes {dimension_semantics = [#tpu.dimension_semantics<arbitrary>], iteration_bounds = array<i64: 1>, scalar_prefetch = 0 : i64, scratch_operands = 0 : i64, tpu.core_type = #tpu.core_type<tc>, window_params = [{transform_indices = @transform_0, window_bounds = array<i64: 112, 512>}, {pipeline_mode = #tpu.pipeline_mode<synchronous>, transform_indices = @transform_1, window_bounds = array<i64: 24, 112>}, {transform_indices = @transform_2, window_bounds = array<i64: 24, 512>}, {pipeline_mode = #tpu.pipeline_mode<synchronous>, transform_indices = @transform_3, window_bounds = array<i64: 24, 1>}, {pipeline_mode = #tpu.pipeline_mode<synchronous>, transform_indices = @transform_4, window_bounds = array<i64: 24, 1>}]} {
    %c0 = arith.constant 0 : index
    %c0_0 = arith.constant 0 : index
    %0 = vector.load %arg2[%c0, %c0_0] : memref<24x112xf32, #tpu.memory_space<vmem>>, vector<24x112xf32>
    %c0_1 = arith.constant 0 : index
    %c0_2 = arith.constant 0 : index
    %1 = vector.load %arg1[%c0_1, %c0_2] : memref<112x512xf32, #tpu.memory_space<vmem>>, vector<112x512xf32>
    %cst = arith.constant dense<0.000000e+00> : vector<24x512xf32>
    %2 = tpu.matmul %0, %1, %cst {dimension_numbers = #tpu.dot_dimension_numbers<[1], [0], [0], [1], [0, 0, 1, 1], [], []>} : vector<24x112xf32>, vector<112x512xf32>, vector<24x512xf32> -> vector<24x512xf32>
    %c0_3 = arith.constant 0 : index
    %c0_4 = arith.constant 0 : index
    %3 = vector.load %arg3[%c0_3, %c0_4] : memref<24x512xf32, #tpu.memory_space<vmem>>, vector<24x512xf32>
    tpu.vector_store %arg3[%c0_3, %c0_4], %2 {strides = array<i32>} : memref<24x512xf32, #tpu.memory_space<vmem>>, vector<24x512xf32>,
    %c0_i32 = arith.constant 0 : i32
    %4 = arith.cmpi eq, %arg0, %c0_i32 : i32
    %5 = arith.extui %4 : i1 to i32
    %c0_i32_5 = arith.constant 0 : i32
    %6 = arith.cmpi ne, %5, %c0_i32_5 : i32
    scf.if %6 {
      %cst_16 = arith.constant 0.000000e+00 : f32
      %18 = vector.broadcast %cst_16 : f32 to vector<24x1xf32>
      %c0_17 = arith.constant 0 : index
      %c0_18 = arith.constant 0 : index
      %19 = vector.load %arg4[%c0_17, %c0_18] : memref<24x1xf32, #tpu.memory_space<vmem>>, vector<24x1xf32>
      tpu.vector_store %arg4[%c0_17, %c0_18], %18 {strides = array<i32>} : memref<24x1xf32, #tpu.memory_space<vmem>>, vector<24x1xf32>,
      %cst_19 = arith.constant 0.000000e+00 : f32
      %20 = vector.broadcast %cst_19 : f32 to vector<24x1xf32>
      %c0_20 = arith.constant 0 : index
      %c0_21 = arith.constant 0 : index
      %21 = vector.load %arg5[%c0_20, %c0_21] : memref<24x1xf32, #tpu.memory_space<vmem>>, vector<24x1xf32>
      tpu.vector_store %arg5[%c0_20, %c0_21], %20 {strides = array<i32>} : memref<24x1xf32, #tpu.memory_space<vmem>>, vector<24x1xf32>,
    } else {
    }
    %c0_6 = arith.constant 0 : index
    %c0_7 = arith.constant 0 : index
    %7 = vector.load %arg4[%c0_6, %c0_7] : memref<24x1xf32, #tpu.memory_space<vmem>>, vector<24x1xf32>
    %cst_8 = arith.constant dense<0.000000e+00> : vector<24xf32>
    %8 = vector.multi_reduction <add>, %2, %cst_8 [1] : vector<24x512xf32> to vector<24xf32>
    %9 = vector.shape_cast %8 : vector<24xf32> to vector<24x1xf32>
    %10 = arith.addf %7, %9 : vector<24x1xf32>
    %c0_9 = arith.constant 0 : index
    %c0_10 = arith.constant 0 : index
    %11 = vector.load %arg4[%c0_9, %c0_10] : memref<24x1xf32, #tpu.memory_space<vmem>>, vector<24x1xf32>
    tpu.vector_store %arg4[%c0_9, %c0_10], %10 {strides = array<i32>} : memref<24x1xf32, #tpu.memory_space<vmem>>, vector<24x1xf32>,
    %c0_11 = arith.constant 0 : index
    %c0_12 = arith.constant 0 : index
    %12 = vector.load %arg5[%c0_11, %c0_12] : memref<24x1xf32, #tpu.memory_space<vmem>>, vector<24x1xf32>
    %13 = arith.mulf %2, %2 : vector<24x512xf32>
    %cst_13 = arith.constant dense<0.000000e+00> : vector<24xf32>
    %14 = vector.multi_reduction <add>, %13, %cst_13 [1] : vector<24x512xf32> to vector<24xf32>
    %15 = vector.shape_cast %14 : vector<24xf32> to vector<24x1xf32>
    %16 = arith.addf %12, %15 : vector<24x1xf32>
    %c0_14 = arith.constant 0 : index
    %c0_15 = arith.constant 0 : index
    %17 = vector.load %arg5[%c0_14, %c0_15] : memref<24x1xf32, #tpu.memory_space<vmem>>, vector<24x1xf32>
    tpu.vector_store %arg5[%c0_14, %c0_15], %16 {strides = array<i32>} : memref<24x1xf32, #tpu.memory_space<vmem>>, vector<24x1xf32>,
    return
  }
  func.func @transform_0(%arg0: i32) -> (i32, i32) {
    %c0_i32 = arith.constant 0 : i32
    %c0_i32_0 = arith.constant 0 : i32
    return %c0_i32, %arg0 : i32, i32
  }
  func.func @transform_1(%arg0: i32) -> (i32, i32) {
    %c0_i32 = arith.constant 0 : i32
    %c0_i32_0 = arith.constant 0 : i32
    %c0_i32_1 = arith.constant 0 : i32
    return %c0_i32, %c0_i32_0 : i32, i32
  }
  func.func @transform_2(%arg0: i32) -> (i32, i32) {
    %c0_i32 = arith.constant 0 : i32
    %c0_i32_0 = arith.constant 0 : i32
    return %c0_i32, %arg0 : i32, i32
  }
  func.func @transform_3(%arg0: i32) -> (i32, i32) {
    %c0_i32 = arith.constant 0 : i32
    %c0_i32_0 = arith.constant 0 : i32
    %c0_i32_1 = arith.constant 0 : i32
    return %c0_i32, %c0_i32_0 : i32, i32
  }
  func.func @transform_4(%arg0: i32) -> (i32, i32) {
    %c0_i32 = arith.constant 0 : i32
    %c0_i32_0 = arith.constant 0 : i32
    %c0_i32_1 = arith.constant 0 : i32
    return %c0_i32, %c0_i32_0 : i32, i32
  }
}

module attributes {stable_mosaic.version = 11 : i64} {
  func.func @_bn_relu_conv4_kernel(%arg0: i32, %arg1: memref<24x512xf32, #tpu.memory_space<vmem>>, %arg2: memref<24x1xf32, #tpu.memory_space<vmem>>, %arg3: memref<24x1xf32, #tpu.memory_space<vmem>>, %arg4: memref<8x24xf32, #tpu.memory_space<vmem>>, %arg5: memref<8x1xf32, #tpu.memory_space<vmem>>, %arg6: memref<8x512xf32, #tpu.memory_space<vmem>>) attributes {dimension_semantics = [#tpu.dimension_semantics<parallel>], iteration_bounds = array<i64: 1>, scalar_prefetch = 0 : i64, scratch_operands = 0 : i64, tpu.core_type = #tpu.core_type<tc>, window_params = [{transform_indices = @transform_0, window_bounds = array<i64: 24, 512>}, {pipeline_mode = #tpu.pipeline_mode<synchronous>, transform_indices = @transform_1, window_bounds = array<i64: 24, 1>}, {pipeline_mode = #tpu.pipeline_mode<synchronous>, transform_indices = @transform_2, window_bounds = array<i64: 24, 1>}, {pipeline_mode = #tpu.pipeline_mode<synchronous>, transform_indices = @transform_3, window_bounds = array<i64: 8, 24>}, {pipeline_mode = #tpu.pipeline_mode<synchronous>, transform_indices = @transform_4, window_bounds = array<i64: 8, 1>}, {transform_indices = @transform_5, window_bounds = array<i64: 8, 512>}]} {
    %c0 = arith.constant 0 : index
    %c0_0 = arith.constant 0 : index
    %0 = vector.load %arg1[%c0, %c0_0] : memref<24x512xf32, #tpu.memory_space<vmem>>, vector<24x512xf32>
    %c0_1 = arith.constant 0 : index
    %c0_2 = arith.constant 0 : index
    %1 = vector.load %arg2[%c0_1, %c0_2] : memref<24x1xf32, #tpu.memory_space<vmem>>, vector<24x1xf32>
    %2 = vector.broadcast %1 : vector<24x1xf32> to vector<24x512xf32>
    %3 = arith.mulf %0, %2 : vector<24x512xf32>
    %c0_3 = arith.constant 0 : index
    %c0_4 = arith.constant 0 : index
    %4 = vector.load %arg3[%c0_3, %c0_4] : memref<24x1xf32, #tpu.memory_space<vmem>>, vector<24x1xf32>
    %5 = vector.broadcast %4 : vector<24x1xf32> to vector<24x512xf32>
    %6 = arith.addf %3, %5 : vector<24x512xf32>
    %cst = arith.constant 0.000000e+00 : f32
    %7 = vector.broadcast %cst : f32 to vector<24x512xf32>
    %8 = arith.maximumf %6, %7 : vector<24x512xf32>
    %c0_5 = arith.constant 0 : index
    %c0_6 = arith.constant 0 : index
    %9 = vector.load %arg4[%c0_5, %c0_6] : memref<8x24xf32, #tpu.memory_space<vmem>>, vector<8x24xf32>
    %cst_7 = arith.constant dense<0.000000e+00> : vector<8x512xf32>
    %10 = tpu.matmul %9, %8, %cst_7 {dimension_numbers = #tpu.dot_dimension_numbers<[1], [0], [0], [1], [0, 0, 1, 1], [], []>} : vector<8x24xf32>, vector<24x512xf32>, vector<8x512xf32> -> vector<8x512xf32>
    %c0_8 = arith.constant 0 : index
    %c0_9 = arith.constant 0 : index
    %11 = vector.load %arg5[%c0_8, %c0_9] : memref<8x1xf32, #tpu.memory_space<vmem>>, vector<8x1xf32>
    %12 = vector.broadcast %11 : vector<8x1xf32> to vector<8x512xf32>
    %13 = arith.addf %10, %12 : vector<8x512xf32>
    %c0_10 = arith.constant 0 : index
    %c0_11 = arith.constant 0 : index
    %14 = vector.load %arg6[%c0_10, %c0_11] : memref<8x512xf32, #tpu.memory_space<vmem>>, vector<8x512xf32>
    tpu.vector_store %arg6[%c0_10, %c0_11], %13 {strides = array<i32>} : memref<8x512xf32, #tpu.memory_space<vmem>>, vector<8x512xf32>,
    return
  }
  func.func @transform_0(%arg0: i32) -> (i32, i32) {
    %c0_i32 = arith.constant 0 : i32
    %c0_i32_0 = arith.constant 0 : i32
    return %c0_i32, %arg0 : i32, i32
  }
  func.func @transform_1(%arg0: i32) -> (i32, i32) {
    %c0_i32 = arith.constant 0 : i32
    %c0_i32_0 = arith.constant 0 : i32
    %c0_i32_1 = arith.constant 0 : i32
    return %c0_i32, %c0_i32_0 : i32, i32
  }
  func.func @transform_2(%arg0: i32) -> (i32, i32) {
    %c0_i32 = arith.constant 0 : i32
    %c0_i32_0 = arith.constant 0 : i32
    %c0_i32_1 = arith.constant 0 : i32
    return %c0_i32, %c0_i32_0 : i32, i32
  }
  func.func @transform_3(%arg0: i32) -> (i32, i32) {
    %c0_i32 = arith.constant 0 : i32
    %c0_i32_0 = arith.constant 0 : i32
    %c0_i32_1 = arith.constant 0 : i32
    return %c0_i32, %c0_i32_0 : i32, i32
  }
  func.func @transform_4(%arg0: i32) -> (i32, i32) {
    %c0_i32 = arith.constant 0 : i32
    %c0_i32_0 = arith.constant 0 : i32
    %c0_i32_1 = arith.constant 0 : i32
    return %c0_i32, %c0_i32_0 : i32, i32
  }
  func.func @transform_5(%arg0: i32) -> (i32, i32) {
    %c0_i32 = arith.constant 0 : i32
    %c0_i32_0 = arith.constant 0 : i32
    return %c0_i32, %arg0 : i32, i32
  }
}

</mosaic_0001>

<llo_original>
// kernel: double_conv_1.3
$region0: #{double_conv_1.3}
  #allocation0 [shape = 'u32[]', space=smem, size = 0x4, offset = 0x4, fixed_abs, tag = 'smem constant byte address 0x4 - core index']
  #allocation1 [shape = 'u32[72,128]{1,0:T(1,128)}', space=vmem, size = 0x9000, scoped, tag = 'internal scratch']
  %s0 = inlined_call_operand.vmem [shape: f32[24,512], index: 0, kind: input, shape index: {}]
  %s1 = inlined_call_operand.vmem [shape: f32[24,1], index: 1, kind: input, shape index: {}]
  %s2 = inlined_call_operand.vmem [shape: f32[24,1], index: 2, kind: input, shape index: {}]
  %s3 = inlined_call_operand.vmem [shape: f32[8,24], index: 3, kind: input, shape index: {}]
  %s4 = inlined_call_operand.vmem [shape: f32[8,1], index: 4, kind: input, shape index: {}]
  %s5 = inlined_call_operand.vmem [shape: f32[8,512], index: 5, kind: output, shape index: {}]
  %s6 = sld [smem:[#allocation0]]
  $region30: #{double_conv_1.3} parent=0
    _
  %s8 = ssub.s32 1, %s6
  %s9 = scalar_select 0, %s8, %s6
  // Predicated region
  $region2: #{double_conv_1.3} parent=0 // pred_check
    _
  $region3: #{double_conv_1.3} parent=0 // pred_check_branch
    %11 = sbr.rel (0) target = $region5
  $region4: #{double_conv_1.3} parent=0 // pred_region
    _
  $region5: #{double_conv_1.3} parent=0 // pred_fallthru
    _
  // Predicated region
  $region6: #{double_conv_1.3} parent=0 // pred_check
    _
  $region7: #{double_conv_1.3} parent=0 // pred_check_branch
    %13 = sbr.rel (0) target = $region9
  $region8: #{double_conv_1.3} parent=0 // pred_region
    _
  $region9: #{double_conv_1.3} parent=0 // pred_fallthru
    _
  // Predicated region
  $region10: #{double_conv_1.3} parent=0 // pred_check
    _
  $region11: #{double_conv_1.3} parent=0 // pred_check_branch
    %15 = sbr.rel (0) target = $region13
  $region12: #{double_conv_1.3} parent=0 // pred_region
    _
  $region13: #{double_conv_1.3} parent=0 // pred_fallthru
    _
  // Predicated region
  $region14: #{double_conv_1.3} parent=0 // pred_check
    _
  $region15: #{double_conv_1.3} parent=0 // pred_check_branch
    %17 = sbr.rel (0) target = $region17
  $region16: #{double_conv_1.3} parent=0 // pred_region
    _
  $region17: #{double_conv_1.3} parent=0 // pred_fallthru
    _
  // Predicated region
  $region18: #{double_conv_1.3} parent=0 // pred_check
    _
  $region19: #{double_conv_1.3} parent=0 // pred_check_branch
    %19 = sbr.rel (0) target = $region21
  $region20: #{double_conv_1.3} parent=0 // pred_region
    _
  $region21: #{double_conv_1.3} parent=0 // pred_fallthru
    _
  %v20 = vld [vmem:[%s0] sm:$0xff]
  %v21 = vld [vmem:[%s0 + $0x8] sm:$0xff]
  %v22 = vld [vmem:[%s0 + $0x10] sm:$0xff]
  %v23 = vld [vmem:[%s0 + $0x18] sm:$0xff]
  %v24 = vld [vmem:[%s0 + $0x20] sm:$0xff]
  %v25 = vld [vmem:[%s0 + $0x28] sm:$0xff]
  %v26 = vld [vmem:[%s0 + $0x30] sm:$0xff]
  %v27 = vld [vmem:[%s0 + $0x38] sm:$0xff]
  %v28 = vld [vmem:[%s0 + $0x40] sm:$0xff]
  %v29 = vld [vmem:[%s0 + $0x48] sm:$0xff]
  %v30 = vld [vmem:[%s0 + $0x50] sm:$0xff]
  %v31 = vld [vmem:[%s0 + $0x58] sm:$0xff]
  %v32 = vld [vmem:[%s1] sm:$0xff]
  %v33 = vld [vmem:[%s1 + $0x8] sm:$0xff]
  %v34 = vld [vmem:[%s1 + $0x10] sm:$0xff]
  %36 = vset.pattern.permute.xlu0 0
  %37 = vperm.xlu0 %36, %v32
  %v38 = vpop.permute.xlu0 %37
  %41 = vset.pattern.permute.xlu0 0
  %42 = vperm.xlu0 %41, %v33
  %v43 = vpop.permute.xlu0 %42
  %46 = vset.pattern.permute.xlu0 0
  %47 = vperm.xlu0 %46, %v34
  %v48 = vpop.permute.xlu0 %47
  %v50 = vmul.f32 %v20, %v38
  %v51 = vmul.f32 %v21, %v38
  %v52 = vmul.f32 %v22, %v38
  %v53 = vmul.f32 %v23, %v38
  %v54 = vmul.f32 %v24, %v43
  %v55 = vmul.f32 %v25, %v43
  %v56 = vmul.f32 %v26, %v43
  %v57 = vmul.f32 %v27, %v43
  %v58 = vmul.f32 %v28, %v48
  %v59 = vmul.f32 %v29, %v48
  %v60 = vmul.f32 %v30, %v48
  %v61 = vmul.f32 %v31, %v48
  %v62 = vld [vmem:[%s2] sm:$0xff]
  %v63 = vld [vmem:[%s2 + $0x8] sm:$0xff]
  %v64 = vld [vmem:[%s2 + $0x10] sm:$0xff]
  %66 = vset.pattern.permute.xlu0 0
  %67 = vperm.xlu0 %66, %v62
  %v68 = vpop.permute.xlu0 %67
  %71 = vset.pattern.permute.xlu0 0
  %72 = vperm.xlu0 %71, %v63
  %v73 = vpop.permute.xlu0 %72
  %76 = vset.pattern.permute.xlu0 0
  %77 = vperm.xlu0 %76, %v64
  %v78 = vpop.permute.xlu0 %77
  %v80 = vadd.f32 %v50, %v68
  %v81 = vadd.f32 %v51, %v68
  %v82 = vadd.f32 %v52, %v68
  %v83 = vadd.f32 %v53, %v68
  %v84 = vadd.f32 %v54, %v73
  %v85 = vadd.f32 %v55, %v73
  %v86 = vadd.f32 %v56, %v73
  %v87 = vadd.f32 %v57, %v73
  %v88 = vadd.f32 %v58, %v78
  %v89 = vadd.f32 %v59, %v78
  %v90 = vadd.f32 %v60, %v78
  %v91 = vadd.f32 %v61, %v78
  %v92 = vmax.f32 %v80, 0.0
  %v93 = vmax.f32 %v81, 0.0
  %v94 = vmax.f32 %v82, 0.0
  %v95 = vmax.f32 %v83, 0.0
  %v96 = vmax.f32 %v84, 0.0
  %v97 = vmax.f32 %v85, 0.0
  %v98 = vmax.f32 %v86, 0.0
  %v99 = vmax.f32 %v87, 0.0
  %v100 = vmax.f32 %v88, 0.0
  %v101 = vmax.f32 %v89, 0.0
  %v102 = vmax.f32 %v90, 0.0
  %v103 = vmax.f32 %v91, 0.0
  %v104 = vld [vmem:[%s3] sm:$0xff]
  %v105 = vld [vmem:[%s4] sm:$0xff]
  %107 = vset.pattern.permute.xlu0 0
  %108 = vperm.xlu0 %107, %v105
  %v109 = vpop.permute.xlu0 %108
  %vm111 = vcmask 195584
  %v113 = vsel %vm111, %v104, 0
  %115 = vmatpush.msra.mxu0 0.0
  %116 = vmatpush.msra.mxu0 0.0
  %117 = vmatpush.msra.mxu0 0.0
  %118 = vmatpush.msra.mxu0 0.0
  %119 = vmatpush.msra.mxu0 0.0
  %120 = vmatpush.msra.mxu0 0.0
  %121 = vmatpush.msra.mxu0 0.0
  %122 = vmatpush.msra.mxu0 0.0
  %123 = vmatpush.msra.mxu0 0.0
  %124 = vmatpush.msra.mxu0 0.0
  %125 = vmatpush.msra.mxu0 0.0
  %126 = vmatpush.msra.mxu0 0.0
  %127 = vmatpush.msra.mxu0 0.0
  %128 = vmatpush.msra.mxu0 %v100
  %129 = vmatpush.msra.mxu0 %v96
  %130 = vmatpush.msra.mxu0 %v92
  %131 = vmatmul.f32.gmra.mxu0 %v113
  %v132 = vpop.f32.mrf.mxu0
  %v133 = vadd.f32 %v109, %v132
  %134 = vdwg.mxu0
  %135 = vmatpush.msra.mxu0 0.0
  %136 = vmatpush.msra.mxu0 0.0
  %137 = vmatpush.msra.mxu0 0.0
  %138 = vmatpush.msra.mxu0 0.0
  %139 = vmatpush.msra.mxu0 0.0
  %140 = vmatpush.msra.mxu0 0.0
  %141 = vmatpush.msra.mxu0 0.0
  %142 = vmatpush.msra.mxu0 0.0
  %143 = vmatpush.msra.mxu0 0.0
  %144 = vmatpush.msra.mxu0 0.0
  %145 = vmatpush.msra.mxu0 0.0
  %146 = vmatpush.msra.mxu0 0.0
  %147 = vmatpush.msra.mxu0 0.0
  %148 = vmatpush.msra.mxu0 %v101
  %149 = vmatpush.msra.mxu0 %v97
  %150 = vmatpush.msra.mxu0 %v93
  %151 = vmatmul.f32.gmra.mxu0 %v113
  %v152 = vpop.f32.mrf.mxu0
  %v153 = vadd.f32 %v109, %v152
  %154 = vdwg.mxu0
  %155 = vmatpush.msra.mxu0 0.0
  %156 = vmatpush.msra.mxu0 0.0
  %157 = vmatpush.msra.mxu0 0.0
  %158 = vmatpush.msra.mxu0 0.0
  %159 = vmatpush.msra.mxu0 0.0
  %160 = vmatpush.msra.mxu0 0.0
  %161 = vmatpush.msra.mxu0 0.0
  %162 = vmatpush.msra.mxu0 0.0
  %163 = vmatpush.msra.mxu0 0.0
  %164 = vmatpush.msra.mxu0 0.0
  %165 = vmatpush.msra.mxu0 0.0
  %166 = vmatpush.msra.mxu0 0.0
  %167 = vmatpush.msra.mxu0 0.0
  %168 = vmatpush.msra.mxu0 %v102
  %169 = vmatpush.msra.mxu0 %v98
  %170 = vmatpush.msra.mxu0 %v94
  %171 = vmatmul.f32.gmra.mxu0 %v113
  %v172 = vpop.f32.mrf.mxu0
  %v173 = vadd.f32 %v109, %v172
  %174 = vdwg.mxu0
  %175 = vmatpush.msra.mxu0 0.0
  %176 = vmatpush.msra.mxu0 0.0
  %177 = vmatpush.msra.mxu0 0.0
  %178 = vmatpush.msra.mxu0 0.0
  %179 = vmatpush.msra.mxu0 0.0
  %180 = vmatpush.msra.mxu0 0.0
  %181 = vmatpush.msra.mxu0 0.0
  %182 = vmatpush.msra.mxu0 0.0
  %183 = vmatpush.msra.mxu0 0.0
  %184 = vmatpush.msra.mxu0 0.0
  %185 = vmatpush.msra.mxu0 0.0
  %186 = vmatpush.msra.mxu0 0.0
  %187 = vmatpush.msra.mxu0 0.0
  %188 = vmatpush.msra.mxu0 %v103
  %189 = vmatpush.msra.mxu0 %v99
  %190 = vmatpush.msra.mxu0 %v95
  %191 = vmatmul.f32.gmra.mxu0 %v113
  %v192 = vpop.f32.mrf.mxu0
  %v193 = vadd.f32 %v109, %v192
  %194 = vdwg.mxu0
  %195 = vst [vmem:[%s5] sm:$0xff] %v133
  %196 = vst [vmem:[%s5 + $0x8] sm:$0xff] %v153
  %197 = vst [vmem:[%s5 + $0x10] sm:$0xff] %v173
  %198 = vst [vmem:[%s5 + $0x18] sm:$0xff] %v193
  // Predicated region
  $region22: #{double_conv_1.3} parent=0 // pred_check
    _
  $region23: #{double_conv_1.3} parent=0 // pred_check_branch
    %200 = sbr.rel (0) target = $region25
  $region24: #{double_conv_1.3} parent=0 // pred_region
    _
  $region25: #{double_conv_1.3} parent=0 // pred_fallthru
    _
  // Predicated region
  $region26: #{double_conv_1.3} parent=0 // pred_check
    _
  $region27: #{double_conv_1.3} parent=0 // pred_check_branch
    %202 = sbr.rel (0) target = $region29
  $region28: #{double_conv_1.3} parent=0 // pred_region
    _
  $region29: #{double_conv_1.3} parent=0 // pred_fallthru
    _

// kernel: double_conv_1.2
$region0: #{double_conv_1.2}
  #allocation0 [shape = 'u32[]', space=smem, size = 0x4, offset = 0x4, fixed_abs, tag = 'smem constant byte address 0x4 - core index']
  #allocation1 [shape = 'u32[72,128]{1,0:T(1,128)}', space=vmem, size = 0x9000, scoped, tag = 'internal scratch']
  %s0 = inlined_call_operand.vmem [shape: f32[112,512], index: 0, kind: input, shape index: {}]
  %s1 = inlined_call_operand.vmem [shape: f32[24,112], index: 1, kind: input, shape index: {}]
  %s2 = inlined_call_operand.vmem [shape: f32[24,512], index: 2, kind: output, shape index: {0}]
  %s3 = inlined_call_operand.vmem [shape: f32[24,1], index: 3, kind: output, shape index: {1}]
  %s4 = inlined_call_operand.vmem [shape: f32[24,1], index: 4, kind: output, shape index: {2}]
  %5 = xla_tuple %s2, %s3, %s4
  %s6 = sld [smem:[#allocation0]]
  $region38: #{double_conv_1.2} parent=0
    _
  %s8 = ssub.s32 1, %s6
  %s9 = scalar_select 0, %s8, %s6
  // Predicated region
  $region2: #{double_conv_1.2} parent=0 // pred_check
    _
  $region3: #{double_conv_1.2} parent=0 // pred_check_branch
    %11 = sbr.rel (0) target = $region5
  $region4: #{double_conv_1.2} parent=0 // pred_region
    _
  $region5: #{double_conv_1.2} parent=0 // pred_fallthru
    _
  // Predicated region
  $region6: #{double_conv_1.2} parent=0 // pred_check
    _
  $region7: #{double_conv_1.2} parent=0 // pred_check_branch
    %13 = sbr.rel (0) target = $region9
  $region8: #{double_conv_1.2} parent=0 // pred_region
    _
  $region9: #{double_conv_1.2} parent=0 // pred_fallthru
    _
  %v14 = vld [vmem:[%s1] sm:$0xff]
  %v15 = vld [vmem:[%s1 + $0x8] sm:$0xff]
  %v16 = vld [vmem:[%s1 + $0x10] sm:$0xff]
  %v17 = vld [vmem:[%s0] sm:$0xff]
  %v18 = vld [vmem:[%s0 + $0x8] sm:$0xff]
  %v19 = vld [vmem:[%s0 + $0x10] sm:$0xff]
  %v20 = vld [vmem:[%s0 + $0x18] sm:$0xff]
  %v21 = vld [vmem:[%s0 + $0x20] sm:$0xff]
  %v22 = vld [vmem:[%s0 + $0x28] sm:$0xff]
  %v23 = vld [vmem:[%s0 + $0x30] sm:$0xff]
  %v24 = vld [vmem:[%s0 + $0x38] sm:$0xff]
  %v25 = vld [vmem:[%s0 + $0x40] sm:$0xff]
  %v26 = vld [vmem:[%s0 + $0x48] sm:$0xff]
  %v27 = vld [vmem:[%s0 + $0x50] sm:$0xff]
  %v28 = vld [vmem:[%s0 + $0x58] sm:$0xff]
  %v29 = vld [vmem:[%s0 + $0x60] sm:$0xff]
  %v30 = vld [vmem:[%s0 + $0x68] sm:$0xff]
  %v31 = vld [vmem:[%s0 + $0x70] sm:$0xff]
  %v32 = vld [vmem:[%s0 + $0x78] sm:$0xff]
  %v33 = vld [vmem:[%s0 + $0x80] sm:$0xff]
  %v34 = vld [vmem:[%s0 + $0x88] sm:$0xff]
  %v35 = vld [vmem:[%s0 + $0x90] sm:$0xff]
  %v36 = vld [vmem:[%s0 + $0x98] sm:$0xff]
  %v37 = vld [vmem:[%s0 + $0xa0] sm:$0xff]
  %v38 = vld [vmem:[%s0 + $0xa8] sm:$0xff]
  %v39 = vld [vmem:[%s0 + $0xb0] sm:$0xff]
  %v40 = vld [vmem:[%s0 + $0xb8] sm:$0xff]
  %v41 = vld [vmem:[%s0 + $0xc0] sm:$0xff]
  %v42 = vld [vmem:[%s0 + $0xc8] sm:$0xff]
  %v43 = vld [vmem:[%s0 + $0xd0] sm:$0xff]
  %v44 = vld [vmem:[%s0 + $0xd8] sm:$0xff]
  %v45 = vld [vmem:[%s0 + $0xe0] sm:$0xff]
  %v46 = vld [vmem:[%s0 + $0xe8] sm:$0xff]
  %v47 = vld [vmem:[%s0 + $0xf0] sm:$0xff]
  %v48 = vld [vmem:[%s0 + $0xf8] sm:$0xff]
  %v49 = vld [vmem:[%s0 + $0x100] sm:$0xff]
  %v50 = vld [vmem:[%s0 + $0x108] sm:$0xff]
  %v51 = vld [vmem:[%s0 + $0x110] sm:$0xff]
  %v52 = vld [vmem:[%s0 + $0x118] sm:$0xff]
  %v53 = vld [vmem:[%s0 + $0x120] sm:$0xff]
  %v54 = vld [vmem:[%s0 + $0x128] sm:$0xff]
  %v55 = vld [vmem:[%s0 + $0x130] sm:$0xff]
  %v56 = vld [vmem:[%s0 + $0x138] sm:$0xff]
  %v57 = vld [vmem:[%s0 + $0x140] sm:$0xff]
  %v58 = vld [vmem:[%s0 + $0x148] sm:$0xff]
  %v59 = vld [vmem:[%s0 + $0x150] sm:$0xff]
  %v60 = vld [vmem:[%s0 + $0x158] sm:$0xff]
  %v61 = vld [vmem:[%s0 + $0x160] sm:$0xff]
  %v62 = vld [vmem:[%s0 + $0x168] sm:$0xff]
  %v63 = vld [vmem:[%s0 + $0x170] sm:$0xff]
  %v64 = vld [vmem:[%s0 + $0x178] sm:$0xff]
  %v65 = vld [vmem:[%s0 + $0x180] sm:$0xff]
  %v66 = vld [vmem:[%s0 + $0x188] sm:$0xff]
  %v67 = vld [vmem:[%s0 + $0x190] sm:$0xff]
  %v68 = vld [vmem:[%s0 + $0x198] sm:$0xff]
  %v69 = vld [vmem:[%s0 + $0x1a0] sm:$0xff]
  %v70 = vld [vmem:[%s0 + $0x1a8] sm:$0xff]
  %v71 = vld [vmem:[%s0 + $0x1b0] sm:$0xff]
  %v72 = vld [vmem:[%s0 + $0x1b8] sm:$0xff]
  %vm73 = vcmask 916480
  %v75 = vsel %vm73, %v14, 0
  %v78 = vsel %vm73, %v15, 0
  %v81 = vsel %vm73, %v16, 0
  %83 = vmatpush.msra.mxu0 0.0
  %84 = vmatpush.msra.mxu0 0.0
  %85 = vmatpush.msra.mxu0 %v69
  %86 = vmatpush.msra.mxu0 %v65
  %87 = vmatpush.msra.mxu0 %v61
  %88 = vmatpush.msra.mxu0 %v57
  %89 = vmatpush.msra.mxu0 %v53
  %90 = vmatpush.msra.mxu0 %v49
  %91 = vmatpush.msra.mxu0 %v45
  %92 = vmatpush.msra.mxu0 %v41
  %93 = vmatpush.msra.mxu0 %v37
  %94 = vmatpush.msra.mxu0 %v33
  %95 = vmatpush.msra.mxu0 %v29
  %96 = vmatpush.msra.mxu0 %v25
  %97 = vmatpush.msra.mxu0 %v21
  %98 = vmatpush.msra.mxu0 %v17
  %99 = vmatmul.f32.gmra.mxu0 %v75
  %v100 = vpop.f32.mrf.mxu0
  %v101 = vadd.f32 0.0, %v100
  %102 = vmatmul.f32.gmra.mxu0 %v78
  %v103 = vpop.f32.mrf.mxu0
  %v104 = vadd.f32 0.0, %v103
  %105 = vmatmul.f32.gmra.mxu0 %v81
  %v106 = vpop.f32.mrf.mxu0
  %v107 = vadd.f32 0.0, %v106
  %108 = vdwg.mxu0
  %109 = vmatpush.msra.mxu0 0.0
  %110 = vmatpush.msra.mxu0 0.0
  %111 = vmatpush.msra.mxu0 %v70
  %112 = vmatpush.msra.mxu0 %v66
  %113 = vmatpush.msra.mxu0 %v62
  %114 = vmatpush.msra.mxu0 %v58
  %115 = vmatpush.msra.mxu0 %v54
  %116 = vmatpush.msra.mxu0 %v50
  %117 = vmatpush.msra.mxu0 %v46
  %118 = vmatpush.msra.mxu0 %v42
  %119 = vmatpush.msra.mxu0 %v38
  %120 = vmatpush.msra.mxu0 %v34
  %121 = vmatpush.msra.mxu0 %v30
  %122 = vmatpush.msra.mxu0 %v26
  %123 = vmatpush.msra.mxu0 %v22
  %124 = vmatpush.msra.mxu0 %v18
  %125 = vmatmul.f32.gmra.mxu0 %v75
  %v126 = vpop.f32.mrf.mxu0
  %v127 = vadd.f32 0.0, %v126
  %128 = vmatmul.f32.gmra.mxu0 %v78
  %v129 = vpop.f32.mrf.mxu0
  %v130 = vadd.f32 0.0, %v129
  %131 = vmatmul.f32.gmra.mxu0 %v81
  %v132 = vpop.f32.mrf.mxu0
  %v133 = vadd.f32 0.0, %v132
  %134 = vdwg.mxu0
  %135 = vmatpush.msra.mxu0 0.0
  %136 = vmatpush.msra.mxu0 0.0
  %137 = vmatpush.msra.mxu0 %v71
  %138 = vmatpush.msra.mxu0 %v67
  %139 = vmatpush.msra.mxu0 %v63
  %140 = vmatpush.msra.mxu0 %v59
  %141 = vmatpush.msra.mxu0 %v55
  %142 = vmatpush.msra.mxu0 %v51
  %143 = vmatpush.msra.mxu0 %v47
  %144 = vmatpush.msra.mxu0 %v43
  %145 = vmatpush.msra.mxu0 %v39
  %146 = vmatpush.msra.mxu0 %v35
  %147 = vmatpush.msra.mxu0 %v31
  %148 = vmatpush.msra.mxu0 %v27
  %149 = vmatpush.msra.mxu0 %v23
  %150 = vmatpush.msra.mxu0 %v19
  %151 = vmatmul.f32.gmra.mxu0 %v75
  %v152 = vpop.f32.mrf.mxu0
  %v153 = vadd.f32 0.0, %v152
  %154 = vmatmul.f32.gmra.mxu0 %v78
  %v155 = vpop.f32.mrf.mxu0
  %v156 = vadd.f32 0.0, %v155
  %157 = vmatmul.f32.gmra.mxu0 %v81
  %v158 = vpop.f32.mrf.mxu0
  %v159 = vadd.f32 0.0, %v158
  %160 = vdwg.mxu0
  %161 = vmatpush.msra.mxu0 0.0
  %162 = vmatpush.msra.mxu0 0.0
  %163 = vmatpush.msra.mxu0 %v72
  %164 = vmatpush.msra.mxu0 %v68
  %165 = vmatpush.msra.mxu0 %v64
  %166 = vmatpush.msra.mxu0 %v60
  %167 = vmatpush.msra.mxu0 %v56
  %168 = vmatpush.msra.mxu0 %v52
  %169 = vmatpush.msra.mxu0 %v48
  %170 = vmatpush.msra.mxu0 %v44
  %171 = vmatpush.msra.mxu0 %v40
  %172 = vmatpush.msra.mxu0 %v36
  %173 = vmatpush.msra.mxu0 %v32
  %174 = vmatpush.msra.mxu0 %v28
  %175 = vmatpush.msra.mxu0 %v24
  %176 = vmatpush.msra.mxu0 %v20
  %177 = vmatmul.f32.gmra.mxu0 %v75
  %v178 = vpop.f32.mrf.mxu0
  %v179 = vadd.f32 0.0, %v178
  %180 = vmatmul.f32.gmra.mxu0 %v78
  %v181 = vpop.f32.mrf.mxu0
  %v182 = vadd.f32 0.0, %v181
  %183 = vmatmul.f32.gmra.mxu0 %v81
  %v184 = vpop.f32.mrf.mxu0
  %v185 = vadd.f32 0.0, %v184
  %186 = vdwg.mxu0
  %187 = vst [vmem:[%s2] sm:$0xff] %v101
  %188 = vst [vmem:[%s2 + $0x8] sm:$0xff] %v127
  %189 = vst [vmem:[%s2 + $0x10] sm:$0xff] %v153
  %190 = vst [vmem:[%s2 + $0x18] sm:$0xff] %v179
  %191 = vst [vmem:[%s2 + $0x20] sm:$0xff] %v104
  %192 = vst [vmem:[%s2 + $0x28] sm:$0xff] %v130
  %193 = vst [vmem:[%s2 + $0x30] sm:$0xff] %v156
  %194 = vst [vmem:[%s2 + $0x38] sm:$0xff] %v182
  %195 = vst [vmem:[%s2 + $0x40] sm:$0xff] %v107
  %196 = vst [vmem:[%s2 + $0x48] sm:$0xff] %v133
  %197 = vst [vmem:[%s2 + $0x50] sm:$0xff] %v159
  %198 = vst [vmem:[%s2 + $0x58] sm:$0xff] %v185
  %p199 = scmp.eq.s32.totalorder 0, 0
  // Predicated region
  $region10: #{double_conv_1.2} parent=0 // pred_check
    %p200 = pneg %p199
  $region11: #{double_conv_1.2} parent=0 // pred_check_branch
    %202 = sbr.rel (%p200) target = $region13
  $region12: #{double_conv_1.2} parent=0 // pred_region
    %vm203 = vcmask 7168
    %204 = vst.msk [vmem:[%s3] sm:$0xff] %vm203, 0.0
    %205 = vst.msk [vmem:[%s3 + $0x8] sm:$0xff] %vm203, 0.0
    %206 = vst.msk [vmem:[%s3 + $0x10] sm:$0xff] %vm203, 0.0
    %207 = vst.msk [vmem:[%s4] sm:$0xff] %vm203, 0.0
    %208 = vst.msk [vmem:[%s4 + $0x8] sm:$0xff] %vm203, 0.0
    %209 = vst.msk [vmem:[%s4 + $0x10] sm:$0xff] %vm203, 0.0
  $region13: #{double_conv_1.2} parent=0 // pred_fallthru
    _
  %v210 = vld [vmem:[%s3] sm:$0xff]
  %v211 = vld [vmem:[%s3 + $0x8] sm:$0xff]
  %v212 = vld [vmem:[%s3 + $0x10] sm:$0xff]
  %v213 = vadd.f32 %v101, %v127
  %v214 = vadd.f32 %v213, %v153
  %v215 = vadd.f32 %v214, %v179
  %216 = vadd.xlane.f32.xlu0 %v215
  %v217 = vpop.xlane.xlu0 %216
  %v218 = vadd.f32 %v104, %v130
  %v219 = vadd.f32 %v218, %v156
  %v220 = vadd.f32 %v219, %v182
  %221 = vadd.xlane.f32.xlu0 %v220
  %v222 = vpop.xlane.xlu0 %221
  %v223 = vadd.f32 %v107, %v133
  %v224 = vadd.f32 %v223, %v159
  %v225 = vadd.f32 %v224, %v185
  %226 = vadd.xlane.f32.xlu0 %v225
  %v227 = vpop.xlane.xlu0 %226
  %v228 = vadd.f32 %v210, %v217
  %v229 = vadd.f32 %v211, %v222
  %v230 = vadd.f32 %v212, %v227
  %vm231 = vcmask 7168
  %232 = vst.msk [vmem:[%s3] sm:$0xff] %vm231, %v228
  %233 = vst.msk [vmem:[%s3 + $0x8] sm:$0xff] %vm231, %v229
  %234 = vst.msk [vmem:[%s3 + $0x10] sm:$0xff] %vm231, %v230
  %v235 = vld [vmem:[%s4] sm:$0xff]
  %v236 = vld [vmem:[%s4 + $0x8] sm:$0xff]
  %v237 = vld [vmem:[%s4 + $0x10] sm:$0xff]
  %v238 = vmul.f32 %v101, %v101
  %v239 = vmul.f32 %v127, %v127
  %v240 = vmul.f32 %v153, %v153
  %v241 = vmul.f32 %v179, %v179
  %v242 = vmul.f32 %v104, %v104
  %v243 = vmul.f32 %v130, %v130
  %v244 = vmul.f32 %v156, %v156
  %v245 = vmul.f32 %v182, %v182
  %v246 = vmul.f32 %v107, %v107
  %v247 = vmul.f32 %v133, %v133
  %v248 = vmul.f32 %v159, %v159
  %v249 = vmul.f32 %v185, %v185
  %v250 = vadd.f32 %v238, %v239
  %v251 = vadd.f32 %v250, %v240
  %v252 = vadd.f32 %v251, %v241
  %253 = vadd.xlane.f32.xlu0 %v252
  %v254 = vpop.xlane.xlu0 %253
  %v255 = vadd.f32 %v242, %v243
  %v256 = vadd.f32 %v255, %v244
  %v257 = vadd.f32 %v256, %v245
  %258 = vadd.xlane.f32.xlu0 %v257
  %v259 = vpop.xlane.xlu0 %258
  %v260 = vadd.f32 %v246, %v247
  %v261 = vadd.f32 %v260, %v248
  %v262 = vadd.f32 %v261, %v249
  %263 = vadd.xlane.f32.xlu0 %v262
  %v264 = vpop.xlane.xlu0 %263
  %v265 = vadd.f32 %v235, %v254
  %v266 = vadd.f32 %v236, %v259
  %v267 = vadd.f32 %v237, %v264
  %268 = vst.msk [vmem:[%s4] sm:$0xff] %vm231, %v265
  %269 = vst.msk [vmem:[%s4 + $0x8] sm:$0xff] %vm231, %v266
  %270 = vst.msk [vmem:[%s4 + $0x10] sm:$0xff] %vm231, %v267
  // Predicated region
  $region14: #{double_conv_1.2} parent=0 // pred_check
    _
  $region15: #{double_conv_1.2} parent=0 // pred_check_branch
    %272 = sbr.rel (0) target = $region17
  $region16: #{double_conv_1.2} parent=0 // pred_region
    _
  $region17: #{double_conv_1.2} parent=0 // pred_fallthru
    _
  // Predicated region
  $region18: #{double_conv_1.2} parent=0 // pred_check
    _
  $region19: #{double_conv_1.2} parent=0 // pred_check_branch
    %274 = sbr.rel (0) target = $region21
  $region20: #{double_conv_1.2} parent=0 // pred_region
    _
  $region21: #{double_conv_1.2} parent=0 // pred_fallthru
    _
  // Predicated region
  $region22: #{double_conv_1.2} parent=0 // pred_check
    _
  $region23: #{double_conv_1.2} parent=0 // pred_check_branch
    %276 = sbr.rel (0) target = $region25
  $region24: #{double_conv_1.2} parent=0 // pred_region
    _
  $region25: #{double_conv_1.2} parent=0 // pred_fallthru
    _
  // Predicated region
  $region26: #{double_conv_1.2} parent=0 // pred_check
    _
  $region27: #{double_conv_1.2} parent=0 // pred_check_branch
    %278 = sbr.rel (0) target = $region29
  $region28: #{double_conv_1.2} parent=0 // pred_region
    _
  $region29: #{double_conv_1.2} parent=0 // pred_fallthru
    _
  // Predicated region
  $region30: #{double_conv_1.2} parent=0 // pred_check
    _
  $region31: #{double_conv_1.2} parent=0 // pred_check_branch
    %280 = sbr.rel (0) target = $region33
  $region32: #{double_conv_1.2} parent=0 // pred_region
    _
  $region33: #{double_conv_1.2} parent=0 // pred_fallthru
    _
  // Predicated region
  $region34: #{double_conv_1.2} parent=0 // pred_check
    _
  $region35: #{double_conv_1.2} parent=0 // pred_check_branch
    %282 = sbr.rel (0) target = $region37
  $region36: #{double_conv_1.2} parent=0 // pred_region
    _
  $region37: #{double_conv_1.2} parent=0 // pred_fallthru
    _

</llo_original>
